<compile_context>
chip_gen: v7x
topology: tpu7x:2x2x1
jax: 0.10.0
libtpu: 0.0.40
codegen_flags: <defaults>
</compile_context>

<pallas_src>
import jax
import jax.numpy as jnp
from jax.experimental import pallas as pl
from jax.experimental.pallas import tpu as pltpu


def _round_up(n, m):
    return ((n + m - 1) // m) * m


def mlp_kernel(x_ref, w1_ref, b1_ref, w2_ref, b2_ref, w3_ref, b3_ref, o_ref):
    # Layer 1: bf16 MXU inputs, f32 accumulation, bias added in f32.
    h = jnp.dot(x_ref[...], w1_ref[...], preferred_element_type=jnp.float32)
    h = h + b1_ref[...]
    # Layer 2: cast activations back to bf16 so the MXU stays on its native path.
    h = jnp.dot(h.astype(w2_ref.dtype), w2_ref[...], preferred_element_type=jnp.float32)
    h = h + b2_ref[...]
    # Layer 3.
    y = jnp.dot(h.astype(w3_ref.dtype), w3_ref[...], preferred_element_type=jnp.float32)
    y = y + b3_ref[...]
    o_ref[...] = y.astype(o_ref.dtype)


def _pad2(a, r, c):
    return jnp.pad(a, ((0, r - a.shape[0]), (0, c - a.shape[1])))


def prepare_params(params, *, compute_dtype=jnp.bfloat16):
    """Pad weights/biases to lane-dense (128-multiple) shapes and cast ONCE.

    Zero rows/cols and zero bias padding contribute nothing, so the math is exact.
    Call this once and reuse the result across mlp_pallas calls (hoists the per-call
    HBM read+write of every weight out of the hot path)."""
    w1, b1 = params["w1"], params["b1"]
    w2, b2 = params["w2"], params["b2"]
    w3, b3 = params["w3"], params["b3"]
    in_dim, hidden_dim = w1.shape
    out_dim = w3.shape[1]
    Kp = _round_up(in_dim, 128)
    Hp = _round_up(hidden_dim, 128)
    Np = _round_up(out_dim, 128)
    return {
        "w1": _pad2(w1, Kp, Hp).astype(compute_dtype),
        "b1": _pad2(b1, 1, Hp).astype(jnp.float32),
        "w2": _pad2(w2, Hp, Hp).astype(compute_dtype),
        "b2": _pad2(b2, 1, Hp).astype(jnp.float32),
        "w3": _pad2(w3, Hp, Np).astype(compute_dtype),
        "b3": _pad2(b3, 1, Np).astype(jnp.float32),
        "dims": (in_dim, hidden_dim, out_dim),
    }


def _vmem_cap_bytes():
    """Generation-aware VMEM ceiling: physical capacity minus ~8 MiB headroom."""
    try:
        cap = int(getattr(pltpu.get_tpu_info(), "vmem_capacity_bytes", 64 << 20))
    except Exception:
        cap = 64 << 20  # conservative (v7x per-TC)
    return max(cap - (8 << 20), 16 << 20)


def _choose_batch_tile(B, block_b):
    """Pick (TB, Bp). TB is a multiple of 128 (or the whole 8-padded batch when
    B <= 128), chosen to (1) minimise batch padding, (2) prefer >= 2 grid steps
    (pipelining + both TCs on v7x), (3) prefer the larger tile."""
    B8 = _round_up(B, 8)
    if B8 <= 128:
        return B8, B8
    block_b = max(128, (block_b // 128) * 128)
    best_key, best_tb, best_bp = None, None, None
    for tb in range(128, min(block_b, _round_up(B8, 128)) + 1, 128):
        bp = _round_up(B8, tb)
        steps = bp // tb
        key = (bp - B8, 0 if steps >= 2 else 1, -tb)
        if best_key is None or key < best_key:
            best_key, best_tb, best_bp = key, tb, bp
    return best_tb, best_bp


def mlp_pallas(x, prepared, *, block_b=256, out_dtype=jnp.float32):
    """x: (B, in_dim) f32. prepared: output of prepare_params()."""
    in_dim, hidden_dim, out_dim = prepared["dims"]
    w1, b1 = prepared["w1"], prepared["b1"]
    w2, b2 = prepared["w2"], prepared["b2"]
    w3, b3 = prepared["w3"], prepared["b3"]
    Kp, Hp = w1.shape
    Np = w3.shape[1]

    B = x.shape[0]
    assert x.shape[1] == in_dim

    TB, Bp = _choose_batch_tile(B, block_b)
    xp = _pad2(x, Bp, Kp).astype(w1.dtype)

    grid = (Bp // TB,)

    # Weight-stationary + single-buffered: constant index_map -> fetched once and
    # resident across grid steps; Buffered(1) avoids allocating an unused 2nd buffer.
    def stat(shape):
        return pl.BlockSpec(shape, lambda i: (0, 0), pipeline_mode=pl.Buffered(1))

    in_specs = [
        pl.BlockSpec((TB, Kp), lambda i: (i, 0)),   # x streamed over batch (2-deep)
        stat((Kp, Hp)), stat((1, Hp)),
        stat((Hp, Hp)), stat((1, Hp)),
        stat((Hp, Np)), stat((1, Np)),
    ]
    out_specs = pl.BlockSpec((TB, Np), lambda i: (i, 0))

    out_bytes = jnp.dtype(out_dtype).itemsize
    # VMEM footprint: single-buffered weights/biases, double-buffered x/out tiles,
    # plus the live intermediates inside the body (h_f32 + h_bf16 + y_f32).
    weight_bytes = (Kp * Hp + Hp * Hp + Hp * Np) * 2 + (2 * Hp + Np) * 4
    tile_bytes = 2 * TB * Kp * 2 + 2 * TB * Np * out_bytes
    interm_bytes = TB * Hp * (4 + 2) + TB * Np * 4
    vmem_limit = int(min(_vmem_cap_bytes(),
                         weight_bytes + tile_bytes + interm_bytes + (4 << 20)))
    # TODO(synk): if single-buffered weight_bytes exceeds ~48 MiB (large hidden dims
    # on v7x's 64 MiB VMEM), add a hidden/K reduction grid axis marked "arbitrary"
    # with an f32 accumulator scratch instead of keeping all weights resident.

    flops = 2 * Bp * (Kp * Hp + Hp * Hp + Hp * Np)
    bytes_accessed = Bp * Kp * 2 + weight_bytes + Bp * Np * out_bytes
    cost = pl.CostEstimate(flops=int(flops), transcendentals=0,
                           bytes_accessed=int(bytes_accessed))

    out_padded = pl.pallas_call(
        mlp_kernel,
        out_shape=jax.ShapeDtypeStruct((Bp, Np), out_dtype),
        grid=grid,
        in_specs=in_specs,
        out_specs=out_specs,
        compiler_params=pltpu.CompilerParams(
            dimension_semantics=("parallel",),
            vmem_limit_bytes=vmem_limit,
        ),
        cost_estimate=cost,
    )(xp, w1, b1, w2, b2, w3, b3)

    return out_padded[:B, :out_dim]


def init_params(key, in_dim, hidden_dim, out_dim):
    """Deterministic init mimicking nn.Linear's uniform(-1/sqrt(fan_in), 1/sqrt(fan_in))."""
    def linear(k, fan_in, fan_out):
        kw, kb = jax.random.split(k)
        bound = 1.0 / jnp.sqrt(fan_in)
        # stored as (fan_in, fan_out) == torch_weight.T
        w = jax.random.uniform(kw, (fan_in, fan_out), jnp.float32, -bound, bound)
        b = jax.random.uniform(kb, (1, fan_out), jnp.float32, -bound, bound)
        return w, b

    k1, k2, k3 = jax.random.split(key, 3)
    w1, b1 = linear(k1, in_dim, hidden_dim)
    w2, b2 = linear(k2, hidden_dim, hidden_dim)
    w3, b3 = linear(k3, hidden_dim, out_dim)
    return {"w1": w1, "b1": b1, "w2": w2, "b2": b2, "w3": w3, "b3": b3}


def mlp_reference(x, p):
    h = x @ p["w1"] + p["b1"]
    h = h @ p["w2"] + p["b2"]
    return h @ p["w3"] + p["b3"]


if __name__ == "__main__":
    key = jax.random.PRNGKey(0)
    kx, kx2, kp = jax.random.split(key, 3)

    in_dim, hidden_dim, out_dim = 32, 64, 16
    params = init_params(kp, in_dim, hidden_dim, out_dim)
    prepared = prepare_params(params)  # pad + bf16 cast once, reused below

    # Small batch: single-tile path, f32 output.
    batch = 8
    x = jax.random.normal(kx, (batch, in_dim), jnp.float32)
    out = jax.block_until_ready(mlp_pallas(x, prepared))
    ref = mlp_reference(x, params)
    assert out.shape == (batch, out_dim)
    # bf16 MXU inputs with f32 accumulation -> loosened tolerance vs f32 reference.
    assert jnp.allclose(out, ref, atol=5e-2, rtol=5e-2), float(jnp.max(jnp.abs(out - ref)))

    # Larger, awkward batch: exercises 128-aligned TB selection, multi-step grid
    # (streaming + "parallel" batch axis) and the optional bf16 output path.
    batch2 = 300
    x2 = jax.random.normal(kx2, (batch2, in_dim), jnp.float32)
    out2 = jax.block_until_ready(mlp_pallas(x2, prepared, out_dtype=jnp.bfloat16))
    ref2 = mlp_reference(x2, params)
    assert out2.shape == (batch2, out_dim)
    assert jnp.allclose(out2.astype(jnp.float32), ref2, atol=1e-1, rtol=1e-1), \
        float(jnp.max(jnp.abs(out2.astype(jnp.float32) - ref2)))

    print("KERNEL_OK")
</pallas_src>

<mosaic_0001>
module attributes {stable_mosaic.version = 11 : i64} {
  func.func @mlp_kernel(%arg0: i32, %arg1: memref<8x128xbf16, #tpu.memory_space<vmem>>, %arg2: memref<128x128xbf16, #tpu.memory_space<vmem>>, %arg3: memref<1x128xf32, #tpu.memory_space<vmem>>, %arg4: memref<128x128xbf16, #tpu.memory_space<vmem>>, %arg5: memref<1x128xf32, #tpu.memory_space<vmem>>, %arg6: memref<128x128xbf16, #tpu.memory_space<vmem>>, %arg7: memref<1x128xf32, #tpu.memory_space<vmem>>, %arg8: memref<8x128xf32, #tpu.memory_space<vmem>>) attributes {dimension_semantics = [#tpu.dimension_semantics<parallel>], iteration_bounds = array<i64: 1>, scalar_prefetch = 0 : i64, scratch_operands = 0 : i64, tpu.core_type = #tpu.core_type<tc>, window_params = [{transform_indices = @transform_0, window_bounds = array<i64: 8, 128>}, {pipeline_mode = #tpu.pipeline_mode<synchronous>, transform_indices = @transform_1, window_bounds = array<i64: 128, 128>}, {pipeline_mode = #tpu.pipeline_mode<synchronous>, transform_indices = @transform_2, window_bounds = array<i64: 1, 128>}, {pipeline_mode = #tpu.pipeline_mode<synchronous>, transform_indices = @transform_3, window_bounds = array<i64: 128, 128>}, {pipeline_mode = #tpu.pipeline_mode<synchronous>, transform_indices = @transform_4, window_bounds = array<i64: 1, 128>}, {pipeline_mode = #tpu.pipeline_mode<synchronous>, transform_indices = @transform_5, window_bounds = array<i64: 128, 128>}, {pipeline_mode = #tpu.pipeline_mode<synchronous>, transform_indices = @transform_6, window_bounds = array<i64: 1, 128>}, {transform_indices = @transform_7, window_bounds = array<i64: 8, 128>}]} {
    %c0 = arith.constant 0 : index
    %c0_0 = arith.constant 0 : index
    %0 = vector.load %arg1[%c0, %c0_0] : memref<8x128xbf16, #tpu.memory_space<vmem>>, vector<8x128xbf16>
    %c0_1 = arith.constant 0 : index
    %c0_2 = arith.constant 0 : index
    %1 = vector.load %arg2[%c0_1, %c0_2] : memref<128x128xbf16, #tpu.memory_space<vmem>>, vector<128x128xbf16>
    %cst = arith.constant dense<0.000000e+00> : vector<8x128xf32>
    %2 = tpu.matmul %0, %1, %cst {dimension_numbers = #tpu.dot_dimension_numbers<[1], [0], [0], [1], [0, 0, 1, 1], [], []>} : vector<8x128xbf16>, vector<128x128xbf16>, vector<8x128xf32> -> vector<8x128xf32>
    %c0_3 = arith.constant 0 : index
    %c0_4 = arith.constant 0 : index
    %3 = vector.load %arg3[%c0_3, %c0_4] : memref<1x128xf32, #tpu.memory_space<vmem>>, vector<1x128xf32>
    %4 = vector.broadcast %3 : vector<1x128xf32> to vector<8x128xf32>
    %5 = arith.addf %2, %4 : vector<8x128xf32>
    %6 = arith.truncf %5 : vector<8x128xf32> to vector<8x128xbf16>
    %c0_5 = arith.constant 0 : index
    %c0_6 = arith.constant 0 : index
    %7 = vector.load %arg4[%c0_5, %c0_6] : memref<128x128xbf16, #tpu.memory_space<vmem>>, vector<128x128xbf16>
    %cst_7 = arith.constant dense<0.000000e+00> : vector<8x128xf32>
    %8 = tpu.matmul %6, %7, %cst_7 {dimension_numbers = #tpu.dot_dimension_numbers<[1], [0], [0], [1], [0, 0, 1, 1], [], []>} : vector<8x128xbf16>, vector<128x128xbf16>, vector<8x128xf32> -> vector<8x128xf32>
    %c0_8 = arith.constant 0 : index
    %c0_9 = arith.constant 0 : index
    %9 = vector.load %arg5[%c0_8, %c0_9] : memref<1x128xf32, #tpu.memory_space<vmem>>, vector<1x128xf32>
    %10 = vector.broadcast %9 : vector<1x128xf32> to vector<8x128xf32>
    %11 = arith.addf %8, %10 : vector<8x128xf32>
    %12 = arith.truncf %11 : vector<8x128xf32> to vector<8x128xbf16>
    %c0_10 = arith.constant 0 : index
    %c0_11 = arith.constant 0 : index
    %13 = vector.load %arg6[%c0_10, %c0_11] : memref<128x128xbf16, #tpu.memory_space<vmem>>, vector<128x128xbf16>
    %cst_12 = arith.constant dense<0.000000e+00> : vector<8x128xf32>
    %14 = tpu.matmul %12, %13, %cst_12 {dimension_numbers = #tpu.dot_dimension_numbers<[1], [0], [0], [1], [0, 0, 1, 1], [], []>} : vector<8x128xbf16>, vector<128x128xbf16>, vector<8x128xf32> -> vector<8x128xf32>
    %c0_13 = arith.constant 0 : index
    %c0_14 = arith.constant 0 : index
    %15 = vector.load %arg7[%c0_13, %c0_14] : memref<1x128xf32, #tpu.memory_space<vmem>>, vector<1x128xf32>
    %16 = vector.broadcast %15 : vector<1x128xf32> to vector<8x128xf32>
    %17 = arith.addf %14, %16 : vector<8x128xf32>
    %c0_15 = arith.constant 0 : index
    %c0_16 = arith.constant 0 : index
    %18 = vector.load %arg8[%c0_15, %c0_16] : memref<8x128xf32, #tpu.memory_space<vmem>>, vector<8x128xf32>
    tpu.vector_store %arg8[%c0_15, %c0_16], %17 {strides = array<i32>} : memref<8x128xf32, #tpu.memory_space<vmem>>, vector<8x128xf32>,
    return
  }
  func.func @transform_0(%arg0: i32) -> (i32, i32) {
    %c0_i32 = arith.constant 0 : i32
    %c0_i32_0 = arith.constant 0 : i32
    return %arg0, %c0_i32 : i32, i32
  }
  func.func @transform_1(%arg0: i32) -> (i32, i32) {
    %c0_i32 = arith.constant 0 : i32
    %c0_i32_0 = arith.constant 0 : i32
    %c0_i32_1 = arith.constant 0 : i32
    return %c0_i32, %c0_i32_0 : i32, i32
  }
  func.func @transform_2(%arg0: i32) -> (i32, i32) {
    %c0_i32 = arith.constant 0 : i32
    %c0_i32_0 = arith.constant 0 : i32
    %c0_i32_1 = arith.constant 0 : i32
    return %c0_i32, %c0_i32_0 : i32, i32
  }
  func.func @transform_3(%arg0: i32) -> (i32, i32) {
    %c0_i32 = arith.constant 0 : i32
    %c0_i32_0 = arith.constant 0 : i32
    %c0_i32_1 = arith.constant 0 : i32
    return %c0_i32, %c0_i32_0 : i32, i32
  }
  func.func @transform_4(%arg0: i32) -> (i32, i32) {
    %c0_i32 = arith.constant 0 : i32
    %c0_i32_0 = arith.constant 0 : i32
    %c0_i32_1 = arith.constant 0 : i32
    return %c0_i32, %c0_i32_0 : i32, i32
  }
  func.func @transform_5(%arg0: i32) -> (i32, i32) {
    %c0_i32 = arith.constant 0 : i32
    %c0_i32_0 = arith.constant 0 : i32
    %c0_i32_1 = arith.constant 0 : i32
    return %c0_i32, %c0_i32_0 : i32, i32
  }
  func.func @transform_6(%arg0: i32) -> (i32, i32) {
    %c0_i32 = arith.constant 0 : i32
    %c0_i32_0 = arith.constant 0 : i32
    %c0_i32_1 = arith.constant 0 : i32
    return %c0_i32, %c0_i32_0 : i32, i32
  }
  func.func @transform_7(%arg0: i32) -> (i32, i32) {
    %c0_i32 = arith.constant 0 : i32
    %c0_i32_0 = arith.constant 0 : i32
    return %arg0, %c0_i32 : i32, i32
  }
}

</mosaic_0001>

<llo_original>
// kernel: tpu_custom_call.1
$region0: #{tpu_custom_call.1}
  #allocation0 [shape = 'u32[]', space=smem, size = 0x4, offset = 0x4, fixed_abs, tag = 'smem constant byte address 0x4 - core index']
  #allocation1 [shape = 'u32[144,128]{1,0:T(1,128)}', space=vmem, size = 0x12000, scoped, tag = 'internal scratch']
  %s0 = inlined_call_operand.hbm [shape: bf16[8,128], index: 0, kind: input, shape index: {}]
  %s1 = inlined_call_operand.hbm [shape: bf16[128,128], index: 1, kind: input, shape index: {}]
  %s2 = inlined_call_operand.vmem [shape: f32[1,128], index: 2, kind: input, shape index: {}]
  %s3 = inlined_call_operand.hbm [shape: bf16[128,128], index: 3, kind: input, shape index: {}]
  %s4 = inlined_call_operand.vmem [shape: f32[1,128], index: 4, kind: input, shape index: {}]
  %s5 = inlined_call_operand.hbm [shape: bf16[128,128], index: 5, kind: input, shape index: {}]
  %s6 = inlined_call_operand.vmem [shape: f32[1,128], index: 6, kind: input, shape index: {}]
  %s7 = inlined_call_operand.hbm [shape: f32[8,128], index: 7, kind: output, shape index: {}]
  %s8 = sld [smem:[#allocation0]]
  $region54: #{tpu_custom_call.1} parent=0
    _
  %s10 = ssub.s32 1, %s8
  %s11 = scalar_select 0, %s10, %s8
  $region1: #{tpu_custom_call.1} parent=0
    #allocation2 [shape = 'u8[2048]{0}', space=vmem, size = 0x800, scoped, tag = 'input window, operand 0, single buffered']
    #allocation3 [shape = 's32[1]{0}', space=sflag, size = 0x4, scoped, tag = 'scoped memory for tpu_custom_call.1']
    #allocation4 [shape = 's32[1]{0}', space=sflag, size = 0x4, scoped, tag = 'scoped memory for tpu_custom_call.1']
    #allocation5 [shape = 'u8[32768]{0}', space=vmem, size = 0x8000, scoped, tag = 'input window, operand 1, single buffered']
    #allocation6 [shape = 's32[1]{0}', space=sflag, size = 0x4, scoped, tag = 'scoped memory for tpu_custom_call.1']
    #allocation7 [shape = 'u8[32768]{0}', space=vmem, size = 0x8000, scoped, tag = 'input window, operand 3, single buffered']
    #allocation8 [shape = 'u8[32768]{0}', space=vmem, size = 0x8000, scoped, tag = 'input window, operand 5, single buffered']
    #allocation9 [shape = 's32[1]{0}', space=sflag, size = 0x4, scoped, tag = 'scoped memory for tpu_custom_call.1']
    #allocation10 [shape = 'u8[4096]{0}', space=vmem, size = 0x1000, scoped, tag = 'output window, operand 0, single buffered']
    %12 = vsyncpa [#allocation3], 0
    %13 = vsyncpa [#allocation6], 0
    %14 = vsyncpa [#allocation9], 0
    %15 = vsyncpa [#allocation4], 0
    // Predicated region
    $region2: #{tpu_custom_call.1} parent=1 // pred_check
      _
    $region3: #{tpu_custom_call.1} parent=1 // pred_check_branch
      %17 = sbr.rel (0) target = $region5
    $region4: #{tpu_custom_call.1} parent=1 // pred_region
      %s19 = ssub.s32 64, 64
      %20 = vsyncadd [#allocation3], %s19
      %s22 = sshll.u32 [#allocation2], 4
      %s23 = int_to_ptr.vmem [resolvable:$true] %s22
      %25 = dma.hbm_to_vmem [thread:$0]  %s0, 64, %s23, [#allocation3]
    $region5: #{tpu_custom_call.1} parent=1 // pred_fallthru
      _
    // Predicated region
    $region6: #{tpu_custom_call.1} parent=1 // pred_check
      _
    $region7: #{tpu_custom_call.1} parent=1 // pred_check_branch
      %27 = sbr.rel (0) target = $region9
    $region8: #{tpu_custom_call.1} parent=1 // pred_region
      %s29 = ssub.s32 1024, 1024
      %30 = vsyncadd [#allocation6], %s29
      %s31 = sshll.u32 [#allocation5], 4
      %s32 = int_to_ptr.vmem [resolvable:$true] %s31
      %37 = dma.hbm_to_vmem [thread:$0]  %s1, 1024, %s32, [#allocation6], 64, 64, 4
    $region9: #{tpu_custom_call.1} parent=1 // pred_fallthru
      _
    // Predicated region
    $region10: #{tpu_custom_call.1} parent=1 // pred_check
      _
    $region11: #{tpu_custom_call.1} parent=1 // pred_check_branch
      %39 = sbr.rel (0) target = $region13
    $region12: #{tpu_custom_call.1} parent=1 // pred_region
      _
    $region13: #{tpu_custom_call.1} parent=1 // pred_fallthru
      _
    // Predicated region
    $region14: #{tpu_custom_call.1} parent=1 // pred_check
      _
    $region15: #{tpu_custom_call.1} parent=1 // pred_check_branch
      %41 = sbr.rel (0) target = $region17
    $region16: #{tpu_custom_call.1} parent=1 // pred_region
      %s43 = ssub.s32 1024, 1024
      %44 = vsyncadd [#allocation6], %s43
      %s45 = sshll.u32 [#allocation7], 4
      %s46 = int_to_ptr.vmem [resolvable:$true] %s45
      %51 = dma.hbm_to_vmem [thread:$0]  %s3, 1024, %s46, [#allocation6], 64, 64, 4
    $region17: #{tpu_custom_call.1} parent=1 // pred_fallthru
      _
    // Predicated region
    $region18: #{tpu_custom_call.1} parent=1 // pred_check
      _
    $region19: #{tpu_custom_call.1} parent=1 // pred_check_branch
      %53 = sbr.rel (0) target = $region21
    $region20: #{tpu_custom_call.1} parent=1 // pred_region
      _
    $region21: #{tpu_custom_call.1} parent=1 // pred_fallthru
      _
    // Predicated region
    $region22: #{tpu_custom_call.1} parent=1 // pred_check
      _
    $region23: #{tpu_custom_call.1} parent=1 // pred_check_branch
      %55 = sbr.rel (0) target = $region25
    $region24: #{tpu_custom_call.1} parent=1 // pred_region
      %s57 = ssub.s32 1024, 1024
      %58 = vsyncadd [#allocation9], %s57
      %s59 = sshll.u32 [#allocation8], 4
      %s60 = int_to_ptr.vmem [resolvable:$true] %s59
      %65 = dma.hbm_to_vmem [thread:$0]  %s5, 1024, %s60, [#allocation9], 64, 64, 4
    $region25: #{tpu_custom_call.1} parent=1 // pred_fallthru
      _
    // Predicated region
    $region26: #{tpu_custom_call.1} parent=1 // pred_check
      _
    $region27: #{tpu_custom_call.1} parent=1 // pred_check_branch
      %67 = sbr.rel (0) target = $region29
    $region28: #{tpu_custom_call.1} parent=1 // pred_region
      _
    $region29: #{tpu_custom_call.1} parent=1 // pred_fallthru
      _
    // Predicated region
    $region30: #{tpu_custom_call.1} parent=1 // pred_check
      _
    $region31: #{tpu_custom_call.1} parent=1 // pred_check_branch
      %69 = sbr.rel (0) target = $region33
    $region32: #{tpu_custom_call.1} parent=1 // pred_region
      %70 = dma.done [#allocation3], 64
    $region33: #{tpu_custom_call.1} parent=1 // pred_fallthru
      _
    // Predicated region
    $region34: #{tpu_custom_call.1} parent=1 // pred_check
      _
    $region35: #{tpu_custom_call.1} parent=1 // pred_check_branch
      %72 = sbr.rel (0) target = $region37
    $region36: #{tpu_custom_call.1} parent=1 // pred_region
      %73 = dma.done [#allocation6], 1024
    $region37: #{tpu_custom_call.1} parent=1 // pred_fallthru
      _
    // Predicated region
    $region38: #{tpu_custom_call.1} parent=1 // pred_check
      _
    $region39: #{tpu_custom_call.1} parent=1 // pred_check_branch
      %75 = sbr.rel (0) target = $region41
    $region40: #{tpu_custom_call.1} parent=1 // pred_region
      %76 = dma.done [#allocation6], 1024
    $region41: #{tpu_custom_call.1} parent=1 // pred_fallthru
      _
    // Predicated region
    $region42: #{tpu_custom_call.1} parent=1 // pred_check
      _
    $region43: #{tpu_custom_call.1} parent=1 // pred_check_branch
      %78 = sbr.rel (0) target = $region45
    $region44: #{tpu_custom_call.1} parent=1 // pred_region
      %79 = dma.done [#allocation9], 1024
    $region45: #{tpu_custom_call.1} parent=1 // pred_fallthru
      _
    %v81 = vld [vmem:[#allocation2] sm:$0xf]
    %v82 = vld [vmem:[#allocation5] sm:$0xf]
    %v83 = vld [vmem:[#allocation5 + $0x4] sm:$0xf]
    %v84 = vld [vmem:[#allocation5 + $0x8] sm:$0xf]
    %v85 = vld [vmem:[#allocation5 + $0xc] sm:$0xf]
    %v86 = vld [vmem:[#allocation5 + $0x10] sm:$0xf]
    %v87 = vld [vmem:[#allocation5 + $0x14] sm:$0xf]
    %v88 = vld [vmem:[#allocation5 + $0x18] sm:$0xf]
    %v89 = vld [vmem:[#allocation5 + $0x1c] sm:$0xf]
    %v90 = vld [vmem:[#allocation5 + $0x20] sm:$0xf]
    %v91 = vld [vmem:[#allocation5 + $0x24] sm:$0xf]
    %v92 = vld [vmem:[#allocation5 + $0x28] sm:$0xf]
    %v93 = vld [vmem:[#allocation5 + $0x2c] sm:$0xf]
    %v94 = vld [vmem:[#allocation5 + $0x30] sm:$0xf]
    %v95 = vld [vmem:[#allocation5 + $0x34] sm:$0xf]
    %v96 = vld [vmem:[#allocation5 + $0x38] sm:$0xf]
    %v97 = vld [vmem:[#allocation5 + $0x3c] sm:$0xf]
    %v98 = vld [vmem:[%s2] sm:$0x1]
    %v100 = vlaneseq
    %v101 = vshrl.u32 %v100, 7
    %v102 = vsub.s32 0, %v101
    %v103 = vrot.slane %v98, %v102
    %v121 = vunpack.c.l.b16 %v82
    %v122 = vunpack.c.l.b16 %v83
    %v123 = vunpack.c.l.b16 %v84
    %v124 = vunpack.c.l.b16 %v85
    %v125 = vunpack.c.l.b16 %v86
    %v126 = vunpack.c.l.b16 %v87
    %v127 = vunpack.c.l.b16 %v88
    %v128 = vunpack.c.l.b16 %v89
    %v129 = vunpack.c.l.b16 %v90
    %v130 = vunpack.c.l.b16 %v91
    %v131 = vunpack.c.l.b16 %v92
    %v132 = vunpack.c.l.b16 %v93
    %v133 = vunpack.c.l.b16 %v94
    %v134 = vunpack.c.l.b16 %v95
    %v135 = vunpack.c.l.b16 %v96
    %v136 = vunpack.c.l.b16 %v97
    %v137 = vpack.c.b16 %v122, %v121
    %v138 = vpack.c.b16 %v124, %v123
    %v139 = vpack.c.b16 %v126, %v125
    %v140 = vpack.c.b16 %v128, %v127
    %v141 = vpack.c.b16 %v130, %v129
    %v142 = vpack.c.b16 %v132, %v131
    %v143 = vpack.c.b16 %v134, %v133
    %v144 = vpack.c.b16 %v136, %v135
    %153 = vmatprep.subr.bf16.mxu0 0
    %154 = vmatpush1.bf16.msra.mxu0 %v137
    %155 = vmatprep.subr.bf16.mxu0 0
    %156 = vmatpush1.bf16.msra.mxu0 %v138
    %157 = vmatprep.subr.bf16.mxu0 0
    %158 = vmatpush1.bf16.msra.mxu0 %v139
    %159 = vmatprep.subr.bf16.mxu0 0
    %160 = vmatpush1.bf16.msra.mxu0 %v140
    %161 = vmatprep.subr.bf16.mxu0 0
    %162 = vmatpush1.bf16.msra.mxu0 %v141
    %163 = vmatprep.subr.bf16.mxu0 0
    %164 = vmatpush1.bf16.msra.mxu0 %v142
    %165 = vmatprep.subr.bf16.mxu0 0
    %166 = vmatpush1.bf16.msra.mxu0 %v143
    %167 = vmatprep.subr.bf16.mxu0 0
    %168 = vmatpush1.bf16.msra.mxu0 %v144
    %169 = vmatprep.subr.bf16.mxu0 0
    %170 = vmatpush1.bf16.msra.mxu0 0
    %171 = vmatprep.subr.bf16.mxu0 0
    %172 = vmatpush1.bf16.msra.mxu0 0
    %173 = vmatprep.subr.bf16.mxu0 0
    %174 = vmatpush1.bf16.msra.mxu0 0
    %175 = vmatprep.subr.bf16.mxu0 0
    %176 = vmatpush1.bf16.msra.mxu0 0
    %177 = vmatprep.subr.bf16.mxu0 0
    %178 = vmatpush1.bf16.msra.mxu0 0
    %179 = vmatprep.subr.bf16.mxu0 0
    %180 = vmatpush1.bf16.msra.mxu0 0
    %181 = vmatprep.subr.bf16.mxu0 0
    %182 = vmatpush1.bf16.msra.mxu0 0
    %183 = vmatprep.subr.bf16.mxu0 0
    %184 = vmatpush1.bf16.msra.mxu0 0
    %185 = vmatprep.mubr.bf16.mxu0 0
    %186 = vmatmul.mubr.bf16.gmra.mrb[0].mxu0 %v81
    %v187 = vpop.f32.mrb[0].mxu0
    %v188 = vadd.f32 %v103, %v187
    %v189 = vpop.f32.mrb[0].mxu0
    %v190 = vpop.f32.mrb[0].mxu0
    %v191 = vpop.f32.mrb[0].mxu0
    %192 = vdwg.mxu0
    %v193 = vpack.c.bf16 %v188, %v188
    %v194 = vld [vmem:[#allocation7] sm:$0xf]
    %v195 = vld [vmem:[#allocation7 + $0x4] sm:$0xf]
    %v196 = vld [vmem:[#allocation7 + $0x8] sm:$0xf]
    %v197 = vld [vmem:[#allocation7 + $0xc] sm:$0xf]
    %v198 = vld [vmem:[#allocation7 + $0x10] sm:$0xf]
    %v199 = vld [vmem:[#allocation7 + $0x14] sm:$0xf]
    %v200 = vld [vmem:[#allocation7 + $0x18] sm:$0xf]
    %v201 = vld [vmem:[#allocation7 + $0x1c] sm:$0xf]
    %v202 = vld [vmem:[#allocation7 + $0x20] sm:$0xf]
    %v203 = vld [vmem:[#allocation7 + $0x24] sm:$0xf]
    %v204 = vld [vmem:[#allocation7 + $0x28] sm:$0xf]
    %v205 = vld [vmem:[#allocation7 + $0x2c] sm:$0xf]
    %v206 = vld [vmem:[#allocation7 + $0x30] sm:$0xf]
    %v207 = vld [vmem:[#allocation7 + $0x34] sm:$0xf]
    %v208 = vld [vmem:[#allocation7 + $0x38] sm:$0xf]
    %v209 = vld [vmem:[#allocation7 + $0x3c] sm:$0xf]
    %v210 = vld [vmem:[%s4] sm:$0x1]
    %v212 = vlaneseq
    %v213 = vshrl.u32 %v212, 7
    %v214 = vsub.s32 0, %v213
    %v215 = vrot.slane %v210, %v214
    %v233 = vunpack.c.l.b16 %v194
    %v234 = vunpack.c.l.b16 %v195
    %v235 = vunpack.c.l.b16 %v196
    %v236 = vunpack.c.l.b16 %v197
    %v237 = vunpack.c.l.b16 %v198
    %v238 = vunpack.c.l.b16 %v199
    %v239 = vunpack.c.l.b16 %v200
    %v240 = vunpack.c.l.b16 %v201
    %v241 = vunpack.c.l.b16 %v202
    %v242 = vunpack.c.l.b16 %v203
    %v243 = vunpack.c.l.b16 %v204
    %v244 = vunpack.c.l.b16 %v205
    %v245 = vunpack.c.l.b16 %v206
    %v246 = vunpack.c.l.b16 %v207
    %v247 = vunpack.c.l.b16 %v208
    %v248 = vunpack.c.l.b16 %v209
    %v249 = vpack.c.b16 %v234, %v233
    %v250 = vpack.c.b16 %v236, %v235
    %v251 = vpack.c.b16 %v238, %v237
    %v252 = vpack.c.b16 %v240, %v239
    %v253 = vpack.c.b16 %v242, %v241
    %v254 = vpack.c.b16 %v244, %v243
    %v255 = vpack.c.b16 %v246, %v245
    %v256 = vpack.c.b16 %v248, %v247
    %265 = vmatprep.subr.bf16.mxu0 0
    %266 = vmatpush1.bf16.msra.mxu0 %v249
    %267 = vmatprep.subr.bf16.mxu0 0
    %268 = vmatpush1.bf16.msra.mxu0 %v250
    %269 = vmatprep.subr.bf16.mxu0 0
    %270 = vmatpush1.bf16.msra.mxu0 %v251
    %271 = vmatprep.subr.bf16.mxu0 0
    %272 = vmatpush1.bf16.msra.mxu0 %v252
    %273 = vmatprep.subr.bf16.mxu0 0
    %274 = vmatpush1.bf16.msra.mxu0 %v253
    %275 = vmatprep.subr.bf16.mxu0 0
    %276 = vmatpush1.bf16.msra.mxu0 %v254
    %277 = vmatprep.subr.bf16.mxu0 0
    %278 = vmatpush1.bf16.msra.mxu0 %v255
    %279 = vmatprep.subr.bf16.mxu0 0
    %280 = vmatpush1.bf16.msra.mxu0 %v256
    %281 = vmatprep.subr.bf16.mxu0 0
    %282 = vmatpush1.bf16.msra.mxu0 0
    %283 = vmatprep.subr.bf16.mxu0 0
    %284 = vmatpush1.bf16.msra.mxu0 0
    %285 = vmatprep.subr.bf16.mxu0 0
    %286 = vmatpush1.bf16.msra.mxu0 0
    %287 = vmatprep.subr.bf16.mxu0 0
    %288 = vmatpush1.bf16.msra.mxu0 0
    %289 = vmatprep.subr.bf16.mxu0 0
    %290 = vmatpush1.bf16.msra.mxu0 0
    %291 = vmatprep.subr.bf16.mxu0 0
    %292 = vmatpush1.bf16.msra.mxu0 0
    %293 = vmatprep.subr.bf16.mxu0 0
    %294 = vmatpush1.bf16.msra.mxu0 0
    %295 = vmatprep.subr.bf16.mxu0 0
    %296 = vmatpush1.bf16.msra.mxu0 0
    %297 = vmatprep.mubr.bf16.mxu0 0
    %298 = vmatmul.mubr.bf16.gmra.mrb[0].mxu0 %v193
    %v299 = vpop.f32.mrb[0].mxu0
    %v300 = vadd.f32 %v215, %v299
    %v301 = vpop.f32.mrb[0].mxu0
    %v302 = vpop.f32.mrb[0].mxu0
    %v303 = vpop.f32.mrb[0].mxu0
    %304 = vdwg.mxu0
    %v305 = vpack.c.bf16 %v300, %v300
    %v306 = vld [vmem:[#allocation8] sm:$0xf]
    %v307 = vld [vmem:[#allocation8 + $0x4] sm:$0xf]
    %v308 = vld [vmem:[#allocation8 + $0x8] sm:$0xf]
    %v309 = vld [vmem:[#allocation8 + $0xc] sm:$0xf]
    %v310 = vld [vmem:[#allocation8 + $0x10] sm:$0xf]
    %v311 = vld [vmem:[#allocation8 + $0x14] sm:$0xf]
    %v312 = vld [vmem:[#allocation8 + $0x18] sm:$0xf]
    %v313 = vld [vmem:[#allocation8 + $0x1c] sm:$0xf]
    %v314 = vld [vmem:[#allocation8 + $0x20] sm:$0xf]
    %v315 = vld [vmem:[#allocation8 + $0x24] sm:$0xf]
    %v316 = vld [vmem:[#allocation8 + $0x28] sm:$0xf]
    %v317 = vld [vmem:[#allocation8 + $0x2c] sm:$0xf]
    %v318 = vld [vmem:[#allocation8 + $0x30] sm:$0xf]
    %v319 = vld [vmem:[#allocation8 + $0x34] sm:$0xf]
    %v320 = vld [vmem:[#allocation8 + $0x38] sm:$0xf]
    %v321 = vld [vmem:[#allocation8 + $0x3c] sm:$0xf]
    %v322 = vld [vmem:[%s6] sm:$0x1]
    %v324 = vlaneseq
    %v325 = vshrl.u32 %v324, 7
    %v326 = vsub.s32 0, %v325
    %v327 = vrot.slane %v322, %v326
    %v345 = vunpack.c.l.b16 %v306
    %v346 = vunpack.c.l.b16 %v307
    %v347 = vunpack.c.l.b16 %v308
    %v348 = vunpack.c.l.b16 %v309
    %v349 = vunpack.c.l.b16 %v310
    %v350 = vunpack.c.l.b16 %v311
    %v351 = vunpack.c.l.b16 %v312
    %v352 = vunpack.c.l.b16 %v313
    %v353 = vunpack.c.l.b16 %v314
    %v354 = vunpack.c.l.b16 %v315
    %v355 = vunpack.c.l.b16 %v316
    %v356 = vunpack.c.l.b16 %v317
    %v357 = vunpack.c.l.b16 %v318
    %v358 = vunpack.c.l.b16 %v319
    %v359 = vunpack.c.l.b16 %v320
    %v360 = vunpack.c.l.b16 %v321
    %v361 = vpack.c.b16 %v346, %v345
    %v362 = vpack.c.b16 %v348, %v347
    %v363 = vpack.c.b16 %v350, %v349
    %v364 = vpack.c.b16 %v352, %v351
    %v365 = vpack.c.b16 %v354, %v353
    %v366 = vpack.c.b16 %v356, %v355
    %v367 = vpack.c.b16 %v358, %v357
    %v368 = vpack.c.b16 %v360, %v359
    %377 = vmatprep.subr.bf16.mxu0 0
    %378 = vmatpush1.bf16.msra.mxu0 %v361
    %379 = vmatprep.subr.bf16.mxu0 0
    %380 = vmatpush1.bf16.msra.mxu0 %v362
    %381 = vmatprep.subr.bf16.mxu0 0
    %382 = vmatpush1.bf16.msra.mxu0 %v363
    %383 = vmatprep.subr.bf16.mxu0 0
    %384 = vmatpush1.bf16.msra.mxu0 %v364
    %385 = vmatprep.subr.bf16.mxu0 0
    %386 = vmatpush1.bf16.msra.mxu0 %v365
    %387 = vmatprep.subr.bf16.mxu0 0
    %388 = vmatpush1.bf16.msra.mxu0 %v366
    %389 = vmatprep.subr.bf16.mxu0 0
    %390 = vmatpush1.bf16.msra.mxu0 %v367
    %391 = vmatprep.subr.bf16.mxu0 0
    %392 = vmatpush1.bf16.msra.mxu0 %v368
    %393 = vmatprep.subr.bf16.mxu0 0
    %394 = vmatpush1.bf16.msra.mxu0 0
    %395 = vmatprep.subr.bf16.mxu0 0
    %396 = vmatpush1.bf16.msra.mxu0 0
    %397 = vmatprep.subr.bf16.mxu0 0
    %398 = vmatpush1.bf16.msra.mxu0 0
    %399 = vmatprep.subr.bf16.mxu0 0
    %400 = vmatpush1.bf16.msra.mxu0 0
    %401 = vmatprep.subr.bf16.mxu0 0
    %402 = vmatpush1.bf16.msra.mxu0 0
    %403 = vmatprep.subr.bf16.mxu0 0
    %404 = vmatpush1.bf16.msra.mxu0 0
    %405 = vmatprep.subr.bf16.mxu0 0
    %406 = vmatpush1.bf16.msra.mxu0 0
    %407 = vmatprep.subr.bf16.mxu0 0
    %408 = vmatpush1.bf16.msra.mxu0 0
    %409 = vmatprep.mubr.bf16.mxu0 0
    %410 = vmatmul.mubr.bf16.gmra.mrb[0].mxu0 %v305
    %v411 = vpop.f32.mrb[0].mxu0
    %v412 = vadd.f32 %v327, %v411
    %v413 = vpop.f32.mrb[0].mxu0
    %v414 = vpop.f32.mrb[0].mxu0
    %v415 = vpop.f32.mrb[0].mxu0
    %416 = vdwg.mxu0
    %417 = vst [vmem:[#allocation10] sm:$0xff] %v412
    // Predicated region
    $region46: #{tpu_custom_call.1} parent=1 // pred_check
      _
    $region47: #{tpu_custom_call.1} parent=1 // pred_check_branch
      %419 = sbr.rel (0) target = $region49
    $region48: #{tpu_custom_call.1} parent=1 // pred_region
      %s421 = ssub.s32 128, 128
      %422 = vsyncadd [#allocation4], %s421
      %s424 = sshll.u32 [#allocation10], 4
      %s425 = int_to_ptr.vmem [resolvable:$true] %s424
      %427 = dma.vmem_to_hbm [thread:$0]  %s425, 128, %s7, [#allocation4]
    $region49: #{tpu_custom_call.1} parent=1 // pred_fallthru
      _
    // Predicated region
    $region50: #{tpu_custom_call.1} parent=1 // pred_check
      _
    $region51: #{tpu_custom_call.1} parent=1 // pred_check_branch
      %429 = sbr.rel (0) target = $region53
    $region52: #{tpu_custom_call.1} parent=1 // pred_region
      %430 = dma.done [#allocation4], 128
    $region53: #{tpu_custom_call.1} parent=1 // pred_fallthru
      _
    %431 = vsyncpa [#allocation3], 1
    %432 = vsyncpa [#allocation6], 1
    %433 = vsyncpa [#allocation9], 1
    %434 = vsyncpa [#allocation4], 1

</llo_original>
